<compile_context>
chip_gen: v5e
topology: v5e:2x2
jax: 0.10.0
libtpu: 0.0.40
codegen_flags: <defaults>
</compile_context>

<pallas_src>
import functools

import jax
import jax.numpy as jnp
from jax.experimental import pallas as pl
from jax.experimental.pallas import tpu as pltpu


def _round_up(x, m):
    return (x + m - 1) // m * m


def _fuse_unit_kernel(x_ref, w_ref, out_ref, *, C, Wp):
    """One grid step == one image's reflect-pad-2 field.

    x_ref:   (Kp, ML) bf16  -- channels on sublanes (F1 | F2 | const-1 | 0pad),
                               flattened padded pixels on lanes.
    w_ref:   (NFp, Kp) bf16 -- every linear map packed into one matrix; the
                               const-1 row's column carries every bias.
    out_ref: (C,  ML) f32   -- blended output on the padded pixel grid
                               (border pixels are garbage, cropped outside).
    """
    ML = x_ref.shape[-1]

    # Single fused MXU matmul: rows 0:C -> proj2(F1), C:2C -> proj3(F2),
    # 2C -> fuse1x(Fcat) pre-sigmoid, 2C+1:2C+10 -> 3x3 conv taps,
    # 2C+10:2C+35 -> 5x5 conv taps (all biases included via the const-1 row).
    yt = jnp.dot(w_ref[...], x_ref[...], preferred_element_type=jnp.float32)

    f1_proj = yt[0:C]          # (C, ML)
    f2_proj = yt[C:2 * C]      # (C, ML)

    def sigmoid(v):
        # 1 / (1 + exp(-v)) with the divide on the EUP approx-reciprocal path.
        return pl.reciprocal(1.0 + jnp.exp(-v), approx=True)

    def tap(row, shift):
        # tap[q] = yt[row, q + shift]. pltpu.roll is circular (== jnp.roll),
        # so wrapped lanes only land on the cropped border pixels because
        # |shift| <= 2*Wp + 2 == flat index of the first interior pixel.
        r = yt[row:row + 1]
        if shift == 0:
            return r
        return pltpu.roll(r, (-shift) % ML, axis=1)

    s1 = yt[2 * C:2 * C + 1]   # fuse1x(Fcat), pre-sigmoid

    # fuse3x: 3x3 conv on reflect-pad-1(Fcat). The pad-1 field equals the
    # pad-2 field offset by (1, 1), so tap (dy, dx) is shift (dy-1)*Wp+(dx-1).
    s3 = None
    for t in range(9):
        dy, dx = divmod(t, 3)
        v = tap(2 * C + 1 + t, (dy - 1) * Wp + (dx - 1))
        s3 = v if s3 is None else s3 + v

    # fuse5x: 5x5 conv on reflect-pad-2(Fcat); tap shift (dy-2)*Wp + (dx-2).
    s5 = None
    for t in range(25):
        dy, dx = divmod(t, 5)
        v = tap(2 * C + 10 + t, (dy - 2) * Wp + (dx - 2))
        s5 = v if s5 is None else s5 + v

    fusion = (sigmoid(s1) + sigmoid(s3) + sigmoid(s5)) * (1.0 / 3.0)
    # fusion is a mean of sigmoids -> always in (0, 1): the reference clamps
    # are no-ops and the blend collapses to a single broadcast FMA.
    out_ref[...] = (f2_proj + fusion * (f1_proj - f2_proj)).astype(out_ref.dtype)


def fuse_unit_forward(f1, f2, params):
    """f1, f2: (B, H, W, C) float32 (NHWC). Returns (B, H, W, C) float32."""
    B, H, W, C = f1.shape
    assert H >= 3 and W >= 3, "reflection pad by 2 needs spatial dims >= 3"
    Hp, Wp = H + 4, W + 4
    Mimg = Hp * Wp
    ML = _round_up(Mimg, 128)          # lane-dense (multiple-of-128) pixel axis
    K_used = 2 * C + 1                 # 2C input channels + constant-1 bias row
    Kp = _round_up(K_used, 16)         # bf16 sublane granule

    # ---- wrapper-side layout prep (XLA fuses this into one copy) ----
    # Reflection pad by 2 commutes with every pointwise projection, so the
    # kernel projects the padded field and the border is cropped afterwards.
    f1p = jnp.pad(f1, ((0, 0), (2, 2), (2, 2), (0, 0)), mode="reflect")
    f2p = jnp.pad(f2, ((0, 0), (2, 2), (2, 2), (0, 0)), mode="reflect")
    xcat = jnp.concatenate([f1p, f2p], axis=-1)                   # (B,Hp,Wp,2C)
    x_cm = jnp.transpose(xcat, (0, 3, 1, 2)).reshape(B, 2 * C, Mimg)
    xt = jnp.concatenate(
        [x_cm,
         jnp.ones((B, 1, Mimg), x_cm.dtype),                      # bias row
         jnp.zeros((B, Kp - K_used, Mimg), x_cm.dtype)], axis=1)  # (B,Kp,Mimg)
    if ML != Mimg:
        xt = jnp.pad(xt, ((0, 0), (0, 0), (0, ML - Mimg)))
    xt = xt.astype(jnp.bfloat16)                                  # halve HBM read

    # ---- pack every linear map (and every bias) into ONE weight matrix ----
    w1 = jnp.concatenate([params["w1a"], params["w1b"]], axis=0)  # (2C, C)
    wf3m = params["wf3"].reshape(9, C).T                          # (C, 9)
    wf5m = params["wf5"].reshape(25, C).T                          # (C, 25)
    zc = jnp.zeros((C, C), jnp.float32)
    wfeat = jnp.concatenate([
        jnp.concatenate([params["w2"], zc], axis=0),   # proj2(F1) columns
        jnp.concatenate([zc, params["w3"]], axis=0),   # proj3(F2) columns
        (w1 @ params["wf1"])[:, None],                 # fuse1x column
        w1 @ wf3m,                                     # 3x3 tap columns
        w1 @ wf5m,                                     # 5x5 tap columns
    ], axis=1)                                         # (2C, 2C+35)
    b1 = params["b1"]
    bias3 = (b1 @ wf3m).at[0].add(params["bf3"][0])    # fold bf3 into one tap
    bias5 = (b1 @ wf5m).at[0].add(params["bf5"][0])    # fold bf5 into one tap
    bias = jnp.concatenate([
        params["b2"], params["b3"],
        (b1 @ params["wf1"] + params["bf1"][0])[None],
        bias3, bias5])                                 # (2C+35,)
    nf_used = wfeat.shape[1]
    NFp = _round_up(nf_used, 8)
    wfull = jnp.zeros((Kp, NFp), jnp.float32)
    wfull = wfull.at[:2 * C, :nf_used].set(wfeat)
    wfull = wfull.at[2 * C, :nf_used].set(bias)        # const-1 row -> biases
    wt = wfull.T.astype(jnp.bfloat16)                  # (NFp, Kp)

    kernel = functools.partial(_fuse_unit_kernel, C=C, Wp=Wp)
    out_cm = pl.pallas_call(
        kernel,
        out_shape=jax.ShapeDtypeStruct((B, C, ML), jnp.float32),
        grid=(B,),                                          # one strip per image
        in_specs=[
            pl.BlockSpec((None, Kp, ML), lambda b: (b, 0, 0)),  # activations
            pl.BlockSpec((NFp, Kp), lambda b: (0, 0)),          # weights (stay resident)
        ],
        out_specs=pl.BlockSpec((None, C, ML), lambda b: (b, 0, 0)),
        compiler_params=pltpu.CompilerParams(
            dimension_semantics=("parallel",),              # v7x megacore split
            vmem_limit_bytes=32 * 1024 * 1024),
    )(xt, wt)

    out = out_cm[:, :, :Mimg].reshape(B, C, Hp, Wp)[:, :, 2:2 + H, 2:2 + W]
    return jnp.transpose(out, (0, 2, 3, 1))


def fuse_unit_reference(f1, f2, p):
    """Pure-JAX reference mirroring the PyTorch forward (NHWC)."""
    hp = lambda a, b: jnp.einsum("bhwc,cd->bhwd", a, b, precision="highest")
    fcat = hp(f1, p["w1a"]) + hp(f2, p["w1b"]) + p["b1"]
    f1p = hp(f1, p["w2"]) + p["b2"]
    f2p = hp(f2, p["w3"]) + p["b3"]

    def convk(xpad, w, b):  # w: (kh, kw, Cin) -> single output channel
        y = jax.lax.conv_general_dilated(
            xpad, w[:, :, :, None], (1, 1), "VALID",
            dimension_numbers=("NHWC", "HWIO", "NHWC"),
            precision=jax.lax.Precision.HIGHEST)
        return y[..., 0] + b

    fus1 = jax.nn.sigmoid(convk(fcat, p["wf1"][None, None, :], p["bf1"]))
    pad3 = jnp.pad(fcat, ((0, 0), (1, 1), (1, 1), (0, 0)), mode="reflect")
    fus3 = jax.nn.sigmoid(convk(pad3, p["wf3"], p["bf3"]))
    pad5 = jnp.pad(fcat, ((0, 0), (2, 2), (2, 2), (0, 0)), mode="reflect")
    fus5 = jax.nn.sigmoid(convk(pad5, p["wf5"], p["bf5"]))
    fusion = (fus1 + fus3 + fus5) / 3.0
    return (jnp.clip(fusion, 0.0, 1.0)[..., None] * f1p
            + jnp.clip(1.0 - fusion, 0.0, 1.0)[..., None] * f2p)


if __name__ == "__main__":
    # NHWC shapes; NCHW (PyTorch) equivalent is (2, 16, 12, 12), channels=16.
    B, H, W, C = 2, 12, 12, 16
    key = jax.random.PRNGKey(0)
    ks = jax.random.split(key, 16)

    def init(k, shape, scale=0.2):
        return jax.random.normal(k, shape, jnp.float32) * scale

    params = {
        # proj1 weight split into the F1 / F2 halves of the 2C input channels.
        "w1a": init(ks[0], (C, C)), "w1b": init(ks[1], (C, C)), "b1": init(ks[2], (C,)),
        "w2": init(ks[3], (C, C)), "b2": init(ks[4], (C,)),
        "w3": init(ks[5], (C, C)), "b3": init(ks[6], (C,)),
        "wf1": init(ks[7], (C,)), "bf1": init(ks[8], (1,)),
        "wf3": init(ks[9], (3, 3, C)), "bf3": init(ks[10], (1,)),
        "wf5": init(ks[11], (5, 5, C)), "bf5": init(ks[12], (1,)),
    }
    f1 = jax.random.normal(ks[13], (B, H, W, C), jnp.float32)
    f2 = jax.random.normal(ks[14], (B, H, W, C), jnp.float32)

    out = jax.block_until_ready(jax.jit(fuse_unit_forward)(f1, f2, params))
    ref = fuse_unit_reference(f1, f2, params)

    assert out.shape == (B, H, W, C)
    err_max = float(jnp.max(jnp.abs(out - ref)))
    err_mean = float(jnp.mean(jnp.abs(out - ref)))
    # Tolerances sized for single-pass bf16 MXU inputs + approx reciprocal vs.
    # an f32 reference; structural bugs (wrong tap/shift/column) give O(1) errors.
    assert err_max < 1.5e-1 and err_mean < 1e-2, (err_max, err_mean)
    print("KERNEL_OK")
</pallas_src>

<mosaic_0001>
module attributes {stable_mosaic.version = 11 : i64} {
  func.func @_fuse_unit_kernel(%arg0: i32, %arg1: memref<1x48x256xbf16, #tpu.memory_space<vmem>>, %arg2: memref<72x48xbf16, #tpu.memory_space<vmem>>, %arg3: memref<1x16x256xf32, #tpu.memory_space<vmem>>) attributes {dimension_semantics = [#tpu.dimension_semantics<parallel>], iteration_bounds = array<i64: 2>, scalar_prefetch = 0 : i64, scratch_operands = 0 : i64, tpu.core_type = #tpu.core_type<tc>, window_params = [{transform_indices = @transform_0, window_bounds = array<i64: 1, 48, 256>}, {pipeline_mode = #tpu.pipeline_mode<synchronous>, transform_indices = @transform_1, window_bounds = array<i64: 72, 48>}, {transform_indices = @transform_2, window_bounds = array<i64: 1, 16, 256>}]} {
    %c0 = arith.constant 0 : index
    %c0_0 = arith.constant 0 : index
    %0 = vector.load %arg2[%c0, %c0_0] : memref<72x48xbf16, #tpu.memory_space<vmem>>, vector<72x48xbf16>
    %c0_1 = arith.constant 0 : index
    %c0_2 = arith.constant 0 : index
    %c0_3 = arith.constant 0 : index
    %1 = vector.load %arg1[%c0_1, %c0_2, %c0_3] : memref<1x48x256xbf16, #tpu.memory_space<vmem>>, vector<1x48x256xbf16>
    %2 = vector.shape_cast %1 : vector<1x48x256xbf16> to vector<48x256xbf16>
    %cst = arith.constant dense<0.000000e+00> : vector<72x256xf32>
    %3 = tpu.matmul %0, %2, %cst {dimension_numbers = #tpu.dot_dimension_numbers<[1], [0], [0], [1], [0, 0, 1, 1], [], []>} : vector<72x48xbf16>, vector<48x256xbf16>, vector<72x256xf32> -> vector<72x256xf32>
    %4 = vector.extract_strided_slice %3 {offsets = [0, 0], sizes = [16, 256], strides = [1, 1]} : vector<72x256xf32> to vector<16x256xf32>
    %5 = vector.extract_strided_slice %3 {offsets = [16, 0], sizes = [16, 256], strides = [1, 1]} : vector<72x256xf32> to vector<16x256xf32>
    %6 = vector.extract_strided_slice %3 {offsets = [32, 0], sizes = [1, 256], strides = [1, 1]} : vector<72x256xf32> to vector<1x256xf32>
    %7 = vector.extract_strided_slice %3 {offsets = [33, 0], sizes = [1, 256], strides = [1, 1]} : vector<72x256xf32> to vector<1x256xf32>
    %c17_i32 = arith.constant 17 : i32
    %8 = tpu.dynamic_rotate %7 by %c17_i32 dim 1 : vector<1x256xf32>, i32 -> vector<1x256xf32>
    %9 = vector.extract_strided_slice %3 {offsets = [34, 0], sizes = [1, 256], strides = [1, 1]} : vector<72x256xf32> to vector<1x256xf32>
    %c16_i32 = arith.constant 16 : i32
    %10 = tpu.dynamic_rotate %9 by %c16_i32 dim 1 : vector<1x256xf32>, i32 -> vector<1x256xf32>
    %11 = arith.addf %8, %10 : vector<1x256xf32>
    %12 = vector.extract_strided_slice %3 {offsets = [35, 0], sizes = [1, 256], strides = [1, 1]} : vector<72x256xf32> to vector<1x256xf32>
    %c15_i32 = arith.constant 15 : i32
    %13 = tpu.dynamic_rotate %12 by %c15_i32 dim 1 : vector<1x256xf32>, i32 -> vector<1x256xf32>
    %14 = arith.addf %11, %13 : vector<1x256xf32>
    %15 = vector.extract_strided_slice %3 {offsets = [36, 0], sizes = [1, 256], strides = [1, 1]} : vector<72x256xf32> to vector<1x256xf32>
    %c1_i32 = arith.constant 1 : i32
    %16 = tpu.dynamic_rotate %15 by %c1_i32 dim 1 : vector<1x256xf32>, i32 -> vector<1x256xf32>
    %17 = arith.addf %14, %16 : vector<1x256xf32>
    %18 = vector.extract_strided_slice %3 {offsets = [37, 0], sizes = [1, 256], strides = [1, 1]} : vector<72x256xf32> to vector<1x256xf32>
    %19 = arith.addf %17, %18 : vector<1x256xf32>
    %20 = vector.extract_strided_slice %3 {offsets = [38, 0], sizes = [1, 256], strides = [1, 1]} : vector<72x256xf32> to vector<1x256xf32>
    %c255_i32 = arith.constant 255 : i32
    %21 = tpu.dynamic_rotate %20 by %c255_i32 dim 1 : vector<1x256xf32>, i32 -> vector<1x256xf32>
    %22 = arith.addf %19, %21 : vector<1x256xf32>
    %23 = vector.extract_strided_slice %3 {offsets = [39, 0], sizes = [1, 256], strides = [1, 1]} : vector<72x256xf32> to vector<1x256xf32>
    %c241_i32 = arith.constant 241 : i32
    %24 = tpu.dynamic_rotate %23 by %c241_i32 dim 1 : vector<1x256xf32>, i32 -> vector<1x256xf32>
    %25 = arith.addf %22, %24 : vector<1x256xf32>
    %26 = vector.extract_strided_slice %3 {offsets = [40, 0], sizes = [1, 256], strides = [1, 1]} : vector<72x256xf32> to vector<1x256xf32>
    %c240_i32 = arith.constant 240 : i32
    %27 = tpu.dynamic_rotate %26 by %c240_i32 dim 1 : vector<1x256xf32>, i32 -> vector<1x256xf32>
    %28 = arith.addf %25, %27 : vector<1x256xf32>
    %29 = vector.extract_strided_slice %3 {offsets = [41, 0], sizes = [1, 256], strides = [1, 1]} : vector<72x256xf32> to vector<1x256xf32>
    %c239_i32 = arith.constant 239 : i32
    %30 = tpu.dynamic_rotate %29 by %c239_i32 dim 1 : vector<1x256xf32>, i32 -> vector<1x256xf32>
    %31 = arith.addf %28, %30 : vector<1x256xf32>
    %32 = vector.extract_strided_slice %3 {offsets = [42, 0], sizes = [1, 256], strides = [1, 1]} : vector<72x256xf32> to vector<1x256xf32>
    %c34_i32 = arith.constant 34 : i32
    %33 = tpu.dynamic_rotate %32 by %c34_i32 dim 1 : vector<1x256xf32>, i32 -> vector<1x256xf32>
    %34 = vector.extract_strided_slice %3 {offsets = [43, 0], sizes = [1, 256], strides = [1, 1]} : vector<72x256xf32> to vector<1x256xf32>
    %c33_i32 = arith.constant 33 : i32
    %35 = tpu.dynamic_rotate %34 by %c33_i32 dim 1 : vector<1x256xf32>, i32 -> vector<1x256xf32>
    %36 = arith.addf %33, %35 : vector<1x256xf32>
    %37 = vector.extract_strided_slice %3 {offsets = [44, 0], sizes = [1, 256], strides = [1, 1]} : vector<72x256xf32> to vector<1x256xf32>
    %c32_i32 = arith.constant 32 : i32
    %38 = tpu.dynamic_rotate %37 by %c32_i32 dim 1 : vector<1x256xf32>, i32 -> vector<1x256xf32>
    %39 = arith.addf %36, %38 : vector<1x256xf32>
    %40 = vector.extract_strided_slice %3 {offsets = [45, 0], sizes = [1, 256], strides = [1, 1]} : vector<72x256xf32> to vector<1x256xf32>
    %c31_i32 = arith.constant 31 : i32
    %41 = tpu.dynamic_rotate %40 by %c31_i32 dim 1 : vector<1x256xf32>, i32 -> vector<1x256xf32>
    %42 = arith.addf %39, %41 : vector<1x256xf32>
    %43 = vector.extract_strided_slice %3 {offsets = [46, 0], sizes = [1, 256], strides = [1, 1]} : vector<72x256xf32> to vector<1x256xf32>
    %c30_i32 = arith.constant 30 : i32
    %44 = tpu.dynamic_rotate %43 by %c30_i32 dim 1 : vector<1x256xf32>, i32 -> vector<1x256xf32>
    %45 = arith.addf %42, %44 : vector<1x256xf32>
    %46 = vector.extract_strided_slice %3 {offsets = [47, 0], sizes = [1, 256], strides = [1, 1]} : vector<72x256xf32> to vector<1x256xf32>
    %c18_i32 = arith.constant 18 : i32
    %47 = tpu.dynamic_rotate %46 by %c18_i32 dim 1 : vector<1x256xf32>, i32 -> vector<1x256xf32>
    %48 = arith.addf %45, %47 : vector<1x256xf32>
    %49 = vector.extract_strided_slice %3 {offsets = [48, 0], sizes = [1, 256], strides = [1, 1]} : vector<72x256xf32> to vector<1x256xf32>
    %c17_i32_4 = arith.constant 17 : i32
    %50 = tpu.dynamic_rotate %49 by %c17_i32_4 dim 1 : vector<1x256xf32>, i32 -> vector<1x256xf32>
    %51 = arith.addf %48, %50 : vector<1x256xf32>
    %52 = vector.extract_strided_slice %3 {offsets = [49, 0], sizes = [1, 256], strides = [1, 1]} : vector<72x256xf32> to vector<1x256xf32>
    %c16_i32_5 = arith.constant 16 : i32
    %53 = tpu.dynamic_rotate %52 by %c16_i32_5 dim 1 : vector<1x256xf32>, i32 -> vector<1x256xf32>
    %54 = arith.addf %51, %53 : vector<1x256xf32>
    %55 = vector.extract_strided_slice %3 {offsets = [50, 0], sizes = [1, 256], strides = [1, 1]} : vector<72x256xf32> to vector<1x256xf32>
    %c15_i32_6 = arith.constant 15 : i32
    %56 = tpu.dynamic_rotate %55 by %c15_i32_6 dim 1 : vector<1x256xf32>, i32 -> vector<1x256xf32>
    %57 = arith.addf %54, %56 : vector<1x256xf32>
    %58 = vector.extract_strided_slice %3 {offsets = [51, 0], sizes = [1, 256], strides = [1, 1]} : vector<72x256xf32> to vector<1x256xf32>
    %c14_i32 = arith.constant 14 : i32
    %59 = tpu.dynamic_rotate %58 by %c14_i32 dim 1 : vector<1x256xf32>, i32 -> vector<1x256xf32>
    %60 = arith.addf %57, %59 : vector<1x256xf32>
    %61 = vector.extract_strided_slice %3 {offsets = [52, 0], sizes = [1, 256], strides = [1, 1]} : vector<72x256xf32> to vector<1x256xf32>
    %c2_i32 = arith.constant 2 : i32
    %62 = tpu.dynamic_rotate %61 by %c2_i32 dim 1 : vector<1x256xf32>, i32 -> vector<1x256xf32>
    %63 = arith.addf %60, %62 : vector<1x256xf32>
    %64 = vector.extract_strided_slice %3 {offsets = [53, 0], sizes = [1, 256], strides = [1, 1]} : vector<72x256xf32> to vector<1x256xf32>
    %c1_i32_7 = arith.constant 1 : i32
    %65 = tpu.dynamic_rotate %64 by %c1_i32_7 dim 1 : vector<1x256xf32>, i32 -> vector<1x256xf32>
    %66 = arith.addf %63, %65 : vector<1x256xf32>
    %67 = vector.extract_strided_slice %3 {offsets = [54, 0], sizes = [1, 256], strides = [1, 1]} : vector<72x256xf32> to vector<1x256xf32>
    %68 = arith.addf %66, %67 : vector<1x256xf32>
    %69 = vector.extract_strided_slice %3 {offsets = [55, 0], sizes = [1, 256], strides = [1, 1]} : vector<72x256xf32> to vector<1x256xf32>
    %c255_i32_8 = arith.constant 255 : i32
    %70 = tpu.dynamic_rotate %69 by %c255_i32_8 dim 1 : vector<1x256xf32>, i32 -> vector<1x256xf32>
    %71 = arith.addf %68, %70 : vector<1x256xf32>
    %72 = vector.extract_strided_slice %3 {offsets = [56, 0], sizes = [1, 256], strides = [1, 1]} : vector<72x256xf32> to vector<1x256xf32>
    %c254_i32 = arith.constant 254 : i32
    %73 = tpu.dynamic_rotate %72 by %c254_i32 dim 1 : vector<1x256xf32>, i32 -> vector<1x256xf32>
    %74 = arith.addf %71, %73 : vector<1x256xf32>
    %75 = vector.extract_strided_slice %3 {offsets = [57, 0], sizes = [1, 256], strides = [1, 1]} : vector<72x256xf32> to vector<1x256xf32>
    %c242_i32 = arith.constant 242 : i32
    %76 = tpu.dynamic_rotate %75 by %c242_i32 dim 1 : vector<1x256xf32>, i32 -> vector<1x256xf32>
    %77 = arith.addf %74, %76 : vector<1x256xf32>
    %78 = vector.extract_strided_slice %3 {offsets = [58, 0], sizes = [1, 256], strides = [1, 1]} : vector<72x256xf32> to vector<1x256xf32>
    %c241_i32_9 = arith.constant 241 : i32
    %79 = tpu.dynamic_rotate %78 by %c241_i32_9 dim 1 : vector<1x256xf32>, i32 -> vector<1x256xf32>
    %80 = arith.addf %77, %79 : vector<1x256xf32>
    %81 = vector.extract_strided_slice %3 {offsets = [59, 0], sizes = [1, 256], strides = [1, 1]} : vector<72x256xf32> to vector<1x256xf32>
    %c240_i32_10 = arith.constant 240 : i32
    %82 = tpu.dynamic_rotate %81 by %c240_i32_10 dim 1 : vector<1x256xf32>, i32 -> vector<1x256xf32>
    %83 = arith.addf %80, %82 : vector<1x256xf32>
    %84 = vector.extract_strided_slice %3 {offsets = [60, 0], sizes = [1, 256], strides = [1, 1]} : vector<72x256xf32> to vector<1x256xf32>
    %c239_i32_11 = arith.constant 239 : i32
    %85 = tpu.dynamic_rotate %84 by %c239_i32_11 dim 1 : vector<1x256xf32>, i32 -> vector<1x256xf32>
    %86 = arith.addf %83, %85 : vector<1x256xf32>
    %87 = vector.extract_strided_slice %3 {offsets = [61, 0], sizes = [1, 256], strides = [1, 1]} : vector<72x256xf32> to vector<1x256xf32>
    %c238_i32 = arith.constant 238 : i32
    %88 = tpu.dynamic_rotate %87 by %c238_i32 dim 1 : vector<1x256xf32>, i32 -> vector<1x256xf32>
    %89 = arith.addf %86, %88 : vector<1x256xf32>
    %90 = vector.extract_strided_slice %3 {offsets = [62, 0], sizes = [1, 256], strides = [1, 1]} : vector<72x256xf32> to vector<1x256xf32>
    %c226_i32 = arith.constant 226 : i32
    %91 = tpu.dynamic_rotate %90 by %c226_i32 dim 1 : vector<1x256xf32>, i32 -> vector<1x256xf32>
    %92 = arith.addf %89, %91 : vector<1x256xf32>
    %93 = vector.extract_strided_slice %3 {offsets = [63, 0], sizes = [1, 256], strides = [1, 1]} : vector<72x256xf32> to vector<1x256xf32>
    %c225_i32 = arith.constant 225 : i32
    %94 = tpu.dynamic_rotate %93 by %c225_i32 dim 1 : vector<1x256xf32>, i32 -> vector<1x256xf32>
    %95 = arith.addf %92, %94 : vector<1x256xf32>
    %96 = vector.extract_strided_slice %3 {offsets = [64, 0], sizes = [1, 256], strides = [1, 1]} : vector<72x256xf32> to vector<1x256xf32>
    %c224_i32 = arith.constant 224 : i32
    %97 = tpu.dynamic_rotate %96 by %c224_i32 dim 1 : vector<1x256xf32>, i32 -> vector<1x256xf32>
    %98 = arith.addf %95, %97 : vector<1x256xf32>
    %99 = vector.extract_strided_slice %3 {offsets = [65, 0], sizes = [1, 256], strides = [1, 1]} : vector<72x256xf32> to vector<1x256xf32>
    %c223_i32 = arith.constant 223 : i32
    %100 = tpu.dynamic_rotate %99 by %c223_i32 dim 1 : vector<1x256xf32>, i32 -> vector<1x256xf32>
    %101 = arith.addf %98, %100 : vector<1x256xf32>
    %102 = vector.extract_strided_slice %3 {offsets = [66, 0], sizes = [1, 256], strides = [1, 1]} : vector<72x256xf32> to vector<1x256xf32>
    %c222_i32 = arith.constant 222 : i32
    %103 = tpu.dynamic_rotate %102 by %c222_i32 dim 1 : vector<1x256xf32>, i32 -> vector<1x256xf32>
    %104 = arith.addf %101, %103 : vector<1x256xf32>
    %cst_12 = arith.constant 0.000000e+00 : f32
    %105 = vector.broadcast %cst_12 : f32 to vector<1x256xf32>
    %106 = arith.subf %105, %6 : vector<1x256xf32>
    %107 = math.exp %106 : vector<1x256xf32>
    %cst_13 = arith.constant 1.000000e+00 : f32
    %108 = vector.broadcast %cst_13 : f32 to vector<1x256xf32>
    %109 = arith.addf %108, %107 : vector<1x256xf32>
    %110 = tpu.reciprocal %109 {approx = true} : vector<1x256xf32> -> vector<1x256xf32>
    %cst_14 = arith.constant 0.000000e+00 : f32
    %111 = vector.broadcast %cst_14 : f32 to vector<1x256xf32>
    %112 = arith.subf %111, %31 : vector<1x256xf32>
    %113 = math.exp %112 : vector<1x256xf32>
    %cst_15 = arith.constant 1.000000e+00 : f32
    %114 = vector.broadcast %cst_15 : f32 to vector<1x256xf32>
    %115 = arith.addf %114, %113 : vector<1x256xf32>
    %116 = tpu.reciprocal %115 {approx = true} : vector<1x256xf32> -> vector<1x256xf32>
    %117 = arith.addf %110, %116 : vector<1x256xf32>
    %cst_16 = arith.constant 0.000000e+00 : f32
    %118 = vector.broadcast %cst_16 : f32 to vector<1x256xf32>
    %119 = arith.subf %118, %104 : vector<1x256xf32>
    %120 = math.exp %119 : vector<1x256xf32>
    %cst_17 = arith.constant 1.000000e+00 : f32
    %121 = vector.broadcast %cst_17 : f32 to vector<1x256xf32>
    %122 = arith.addf %121, %120 : vector<1x256xf32>
    %123 = tpu.reciprocal %122 {approx = true} : vector<1x256xf32> -> vector<1x256xf32>
    %124 = arith.addf %117, %123 : vector<1x256xf32>
    %cst_18 = arith.constant 0.333333343 : f32
    %125 = vector.broadcast %cst_18 : f32 to vector<1x256xf32>
    %126 = arith.mulf %124, %125 : vector<1x256xf32>
    %127 = arith.subf %4, %5 : vector<16x256xf32>
    %128 = vector.broadcast %126 : vector<1x256xf32> to vector<16x256xf32>
    %129 = arith.mulf %128, %127 : vector<16x256xf32>
    %130 = arith.addf %5, %129 : vector<16x256xf32>
    %c0_19 = arith.constant 0 : index
    %c0_20 = arith.constant 0 : index
    %c0_21 = arith.constant 0 : index
    %131 = vector.load %arg3[%c0_19, %c0_20, %c0_21] : memref<1x16x256xf32, #tpu.memory_space<vmem>>, vector<1x16x256xf32>
    %132 = vector.shape_cast %131 : vector<1x16x256xf32> to vector<16x256xf32>
    %133 = vector.shape_cast %130 : vector<16x256xf32> to vector<1x16x256xf32>
    tpu.vector_store %arg3[%c0_19, %c0_20, %c0_21], %133 {strides = array<i32>} : memref<1x16x256xf32, #tpu.memory_space<vmem>>, vector<1x16x256xf32>,
    return
  }
  func.func @transform_0(%arg0: i32) -> (i32, i32, i32) {
    %c0_i32 = arith.constant 0 : i32
    %c0_i32_0 = arith.constant 0 : i32
    %c0_i32_1 = arith.constant 0 : i32
    return %arg0, %c0_i32, %c0_i32_0 : i32, i32, i32
  }
  func.func @transform_1(%arg0: i32) -> (i32, i32) {
    %c0_i32 = arith.constant 0 : i32
    %c0_i32_0 = arith.constant 0 : i32
    %c0_i32_1 = arith.constant 0 : i32
    return %c0_i32, %c0_i32_0 : i32, i32
  }
  func.func @transform_2(%arg0: i32) -> (i32, i32, i32) {
    %c0_i32 = arith.constant 0 : i32
    %c0_i32_0 = arith.constant 0 : i32
    %c0_i32_1 = arith.constant 0 : i32
    return %arg0, %c0_i32, %c0_i32_0 : i32, i32, i32
  }
}

</mosaic_0001>

<llo_original>
// kernel: fuse_unit_forward.1
$region0: #{fuse_unit_forward.1}
  #allocation0 [shape = 'u32[]', space=smem, size = 0x4, offset = 0x4, fixed_abs, tag = 'smem constant byte address 0x4 - core index']
  #allocation1 [shape = 'u32[72,128]{1,0:T(1,128)}', space=vmem, size = 0x9000, scoped, tag = 'internal scratch']
  %s0 = inlined_call_operand.vmem [shape: bf16[2,48,256], index: 0, kind: input, shape index: {}]
  %s1 = inlined_call_operand.vmem [shape: bf16[72,48], index: 1, kind: input, shape index: {}]
  %s2 = inlined_call_operand.vmem [shape: f32[2,16,256], index: 2, kind: output, shape index: {}]
  %s3 = sld [smem:[#allocation0]]
  $region41: #{fuse_unit_forward.1} parent=0
    _
  %s5 = ssub.s32 1, %s3
  %s6 = scalar_select 0, %s5, %s3
  loop: start=0, step=1, limit=4
  $region2: #{fuse_unit_forward.1} parent=0 // loop_pre_header
    _
  $region3: #{fuse_unit_forward.1} parent=0 // loop_header
    %s8 = sphi 0, %s12
    %p9 = scmp.ge.s32.totalorder %s8, 4
    %s18 = sphi 0, %s20
    %s21 = sphi 0, %s18
    %s22 = sphi 0, %s21
    %s38 = sphi 0, %s22
    %s42 = sphi 0, %s42
    %s44 = sphi 0, %s42
    %s45 = sphi 0, %s44
    %s59 = sphi 0, %s45
    %s65 = sphi 0, %s67
    %s68 = sphi 0, %s65
    %s69 = sphi 0, %s68
    %s85 = sphi 0, %s69
  $region4: #{fuse_unit_forward.1} parent=0 // loop_header_branch
    %11 = sbr.rel (%p9) target = $region8
  $region5: #{fuse_unit_forward.1} parent=0 // loop_body
    %s13 = ssub.s32 %s8, 1
    %s14 = ssub.s32 %s8, 2
    %s15 = sadd.s32 %s8, 1
    %s16 = ssub.s32 %s8, %s15
    %p17 = scmp.eq.s32.totalorder %s16, 0
    %s19 = sadd.s32 %s18, 1
    %s20 = scalar_select %p17, %s18, %s19
    %p23 = pneg %p17
    %p24 = scmp.eq.s32.totalorder %s8, 1
    %p25 = por %p23, %p24
    %p26 = scmp.ne.s32.totalorder %s18, %s21
    %p27 = scmp.eq.s32.totalorder %s8, 0
    %p28 = por %p26, %p27
    %p29 = scmp.ne.s32.totalorder %s18, %s21
    %p30 = scmp.eq.s32.totalorder %s13, 1
    %p31 = por %p29, %p30
    %p32 = scmp.ne.s32.totalorder %s21, %s22
    %p33 = scmp.eq.s32.totalorder %s13, 0
    %p34 = por %p32, %p33
    %p35 = scmp.ne.s32.totalorder %s21, %s22
    %p36 = scmp.eq.s32.totalorder %s14, 1
    %p37 = por %p35, %p36
    %p39 = scmp.ne.s32.totalorder %s22, %s38
    %p40 = scmp.eq.s32.totalorder %s14, 0
    %p41 = por %p39, %p40
    %s43 = sadd.s32 %s42, 1
    %p46 = scmp.eq.s32.totalorder %s8, 1
    %p47 = scmp.ne.s32.totalorder %s42, %s44
    %p48 = scmp.eq.s32.totalorder %s8, 0
    %p49 = por %p47, %p48
    %p50 = scmp.ne.s32.totalorder %s42, %s44
    %p51 = scmp.eq.s32.totalorder %s13, 1
    %p52 = por %p50, %p51
    %p53 = scmp.ne.s32.totalorder %s44, %s45
    %p54 = scmp.eq.s32.totalorder %s13, 0
    %p55 = por %p53, %p54
    %p56 = scmp.ne.s32.totalorder %s44, %s45
    %p57 = scmp.eq.s32.totalorder %s14, 1
    %p58 = por %p56, %p57
    %p60 = scmp.ne.s32.totalorder %s45, %s59
    %p61 = scmp.eq.s32.totalorder %s14, 0
    %p62 = por %p60, %p61
    %s63 = ssub.s32 %s8, %s15
    %p64 = scmp.eq.s32.totalorder %s63, 0
    %s66 = sadd.s32 %s65, 1
    %s67 = scalar_select %p64, %s65, %s66
    %p70 = pneg %p64
    %p71 = scmp.eq.s32.totalorder %s8, 1
    %p72 = por %p70, %p71
    %p73 = scmp.ne.s32.totalorder %s65, %s68
    %p74 = scmp.eq.s32.totalorder %s8, 0
    %p75 = por %p73, %p74
    %p76 = scmp.ne.s32.totalorder %s65, %s68
    %p77 = scmp.eq.s32.totalorder %s13, 1
    %p78 = por %p76, %p77
    %p79 = scmp.ne.s32.totalorder %s68, %s69
    %p80 = scmp.eq.s32.totalorder %s13, 0
    %p81 = por %p79, %p80
    %p82 = scmp.ne.s32.totalorder %s68, %s69
    %p83 = scmp.eq.s32.totalorder %s14, 1
    %p84 = por %p82, %p83
    %p86 = scmp.ne.s32.totalorder %s69, %s85
    %p87 = scmp.eq.s32.totalorder %s14, 0
    %p88 = por %p86, %p87
    %p89 = scmp.le.s32.totalorder 1, %s8
    %p90 = scmp.lt.s32.totalorder %s8, 3
    %p91 = pnand %p89, %p90
    %p92 = pneg %p91
    // Predicated region
    $region9: #{fuse_unit_forward.1} parent=5 // pred_check
      _
    $region10: #{fuse_unit_forward.1} parent=5 // pred_check_branch
      %94 = sbr.rel (%p91) target = $region12
    $region11: #{fuse_unit_forward.1} parent=5 // pred_region
      %s95 = ssub.s32 %s8, 1
      // Predicated region
      $region13: #{fuse_unit_forward.1} parent=11 // pred_check
        %p96 = pneg %p55
      $region14: #{fuse_unit_forward.1} parent=11 // pred_check_branch
        %98 = sbr.rel (%p96) target = $region16
      $region15: #{fuse_unit_forward.1} parent=11 // pred_region
        _
      $region16: #{fuse_unit_forward.1} parent=11 // pred_fallthru
        _
    $region12: #{fuse_unit_forward.1} parent=5 // pred_fallthru
      _
    %p99 = scmp.lt.s32.totalorder %s8, 2
    // Predicated region
    $region17: #{fuse_unit_forward.1} parent=5 // pred_check
      %p100 = pneg %p99
    $region18: #{fuse_unit_forward.1} parent=5 // pred_check_branch
      %102 = sbr.rel (%p100) target = $region20
    $region19: #{fuse_unit_forward.1} parent=5 // pred_region
      // Predicated region
      $region21: #{fuse_unit_forward.1} parent=19 // pred_check
        %p103 = pneg %p28
      $region22: #{fuse_unit_forward.1} parent=19 // pred_check_branch
        %105 = sbr.rel (%p103) target = $region24
      $region23: #{fuse_unit_forward.1} parent=19 // pred_region
        %p106 = scmp.lt.s32.totalorder %s8, 1
        %s107 = scalar_select %p106, %s8, 1
        %s108 = smul.addr %s107, 12
        %s109 = smul.addr %s108, 4
        %s110 = scalar_lea.vmem %s0, %s109
      $region24: #{fuse_unit_forward.1} parent=19 // pred_fallthru
        _
    $region20: #{fuse_unit_forward.1} parent=5 // pred_fallthru
      _
    %p111 = scmp.le.s32.totalorder 1, %s8
    %p112 = scmp.lt.s32.totalorder %s8, 3
    %p113 = pnand %p111, %p112
    %p114 = pneg %p113
    // Predicated region
    $region25: #{fuse_unit_forward.1} parent=5 // pred_check
      _
    $region26: #{fuse_unit_forward.1} parent=5 // pred_check_branch
      %116 = sbr.rel (%p113) target = $region28
    $region27: #{fuse_unit_forward.1} parent=5 // pred_region
      %s117 = ssub.s32 %s8, 1
      %p118 = scmp.lt.s32.totalorder %s13, 1
      %s119 = scalar_select %p118, %s13, 1
      %s120 = smul.addr %s119, 12
      %s121 = smul.addr %s120, 4
      %s122 = scalar_lea.vmem %s0, %s121
      %p123 = pneg %p34
      %p124 = pneg %p31
      %p125 = pneg %p55
      %p126 = pneg %p52
      %p127 = pneg %p81
      %p128 = pneg %p78
      %p129 = scmp.lt.s32.totalorder %s13, 1
      %s130 = scalar_select %p129, %s13, 1
      %s131 = smul.addr %s130, 4
      %s132 = smul.addr %s131, 8
      %s133 = scalar_lea.vmem %s2, %s132
      %p134 = scmp.lt.s32.totalorder %s13, 1
      %s135 = scalar_select %p134, %s13, 1
      %s136 = smul.addr %s135, 12
      %s137 = smul.addr %s136, 4
      %s138 = scalar_lea.vmem %s0, %s137
      %p139 = scmp.lt.s32.totalorder %s13, 1
      %s140 = scalar_select %p139, %s13, 1
      %s141 = smul.addr %s140, 4
      %s142 = smul.addr %s141, 8
      %s143 = scalar_lea.vmem %s2, %s142
      %v145 = vld [vmem:[%s1] sm:$0xf]
      %v146 = vld [vmem:[%s1 + $0x4] sm:$0xf]
      %v147 = vld [vmem:[%s1 + $0x8] sm:$0xf]
      %v148 = vld [vmem:[%s1 + $0xc] sm:$0xf]
      %v149 = vld [vmem:[%s1 + $0x10] sm:$0xf]
      %v150 = vld [vmem:[%s1 + $0x14] sm:$0xf]
      %v151 = vld [vmem:[%s1 + $0x18] sm:$0xf]
      %v152 = vld [vmem:[%s1 + $0x1c] sm:$0xf]
      %v153 = vld [vmem:[%s1 + $0x20] sm:$0xf]
      %v154 = vld [vmem:[%s138] sm:$0xff]
      %v155 = vld [vmem:[%s138 + $0x8] sm:$0xff]
      %v156 = vld [vmem:[%s138 + $0x10] sm:$0xff]
      %v157 = vld [vmem:[%s138 + $0x18] sm:$0xff]
      %v158 = vld [vmem:[%s138 + $0x20] sm:$0xff]
      %v159 = vld [vmem:[%s138 + $0x28] sm:$0xff]
      %v169 = vunpack.c.l.b16 %v145
      %v170 = vunpack.c.l.b16 %v146
      %v171 = vunpack.c.l.b16 %v147
      %v172 = vunpack.c.l.b16 %v148
      %v173 = vunpack.c.l.b16 %v149
      %v174 = vunpack.c.l.b16 %v150
      %v175 = vunpack.c.l.b16 %v151
      %v176 = vunpack.c.l.b16 %v152
      %v177 = vunpack.c.l.b16 %v153
      %v178 = vpack.c.b16 %v170, %v169
      %v179 = vpack.c.b16 %v172, %v171
      %v180 = vpack.c.b16 %v174, %v173
      %v181 = vpack.c.b16 %v176, %v175
      %v182 = vpack.c.b16 %v177, %v177
      %v189 = vunpack.c.l.b16 %v154
      %v190 = vunpack.c.h.b16 %v154
      %v191 = vunpack.c.l.b16 %v155
      %v192 = vunpack.c.h.b16 %v155
      %v193 = vunpack.c.l.b16 %v156
      %v194 = vunpack.c.h.b16 %v156
      %v195 = vunpack.c.l.b16 %v157
      %v196 = vunpack.c.h.b16 %v157
      %v197 = vunpack.c.l.b16 %v158
      %v198 = vunpack.c.h.b16 %v158
      %v199 = vunpack.c.l.b16 %v159
      %v200 = vunpack.c.h.b16 %v159
      %v201 = vpack.c.b16 %v191, %v189
      %v202 = vpack.c.b16 %v192, %v190
      %v203 = vpack.c.b16 %v195, %v193
      %v204 = vpack.c.b16 %v196, %v194
      %v205 = vpack.c.b16 %v199, %v197
      %v206 = vpack.c.b16 %v200, %v198
      %vm213 = vcmask 392192
      %v215 = vsel %vm213, %v178, 0
      %v218 = vsel %vm213, %v179, 0
      %v221 = vsel %vm213, %v180, 0
      %v224 = vsel %vm213, %v181, 0
      %v227 = vsel %vm213, %v182, 0
      %229 = vmatpush.bf16.msra.mxu0 0
      %230 = vmatpush.bf16.msra.mxu0 0
      %231 = vmatpush.bf16.msra.mxu0 0
      %232 = vmatpush.bf16.msra.mxu0 0
      %233 = vmatpush.bf16.msra.mxu0 0
      %234 = vmatpush.bf16.msra.mxu0 %v205
      %235 = vmatpush.bf16.msra.mxu0 %v203
      %236 = vmatpush.bf16.msra.mxu0 %v201
      %237 = vmatmul.bf16.gmra.mxu0 %v215
      %v238 = vpop.f32.mrf.mxu0
      %v239 = vadd.f32 0.0, %v238
      %v240 = vpop.f32.mrf.mxu0
      %v241 = vadd.f32 0.0, %v240
      %242 = vmatmul.bf16.gmra.mxu0 %v218
      %v243 = vpop.f32.mrf.mxu0
      %v244 = vadd.f32 0.0, %v243
      %v245 = vpop.f32.mrf.mxu0
      %v246 = vadd.f32 0.0, %v245
      %247 = vmatmul.bf16.gmra.mxu0 %v221
      %v248 = vpop.f32.mrf.mxu0
      %v249 = vadd.f32 0.0, %v248
      %v250 = vpop.f32.mrf.mxu0
      %v251 = vadd.f32 0.0, %v250
      %252 = vmatmul.bf16.gmra.mxu0 %v224
      %v253 = vpop.f32.mrf.mxu0
      %v254 = vadd.f32 0.0, %v253
      %v255 = vpop.f32.mrf.mxu0
      %v256 = vadd.f32 0.0, %v255
      %257 = vmatmul.bf16.gmra.mxu0 %v227
      %v258 = vpop.f32.mrf.mxu0
      %v259 = vadd.f32 0.0, %v258
      %v260 = vpop.f32.mrf.mxu0
      %261 = vdwg.mxu0
      %262 = vmatpush.bf16.msra.mxu0 0
      %263 = vmatpush.bf16.msra.mxu0 0
      %264 = vmatpush.bf16.msra.mxu0 0
      %265 = vmatpush.bf16.msra.mxu0 0
      %266 = vmatpush.bf16.msra.mxu0 0
      %267 = vmatpush.bf16.msra.mxu0 %v206
      %268 = vmatpush.bf16.msra.mxu0 %v204
      %269 = vmatpush.bf16.msra.mxu0 %v202
      %270 = vmatmul.bf16.gmra.mxu0 %v215
      %v271 = vpop.f32.mrf.mxu0
      %v272 = vadd.f32 0.0, %v271
      %v273 = vpop.f32.mrf.mxu0
      %v274 = vadd.f32 0.0, %v273
      %275 = vmatmul.bf16.gmra.mxu0 %v218
      %v276 = vpop.f32.mrf.mxu0
      %v277 = vadd.f32 0.0, %v276
      %v278 = vpop.f32.mrf.mxu0
      %v279 = vadd.f32 0.0, %v278
      %280 = vmatmul.bf16.gmra.mxu0 %v221
      %v281 = vpop.f32.mrf.mxu0
      %v282 = vadd.f32 0.0, %v281
      %v283 = vpop.f32.mrf.mxu0
      %v284 = vadd.f32 0.0, %v283
      %285 = vmatmul.bf16.gmra.mxu0 %v224
      %v286 = vpop.f32.mrf.mxu0
      %v287 = vadd.f32 0.0, %v286
      %v288 = vpop.f32.mrf.mxu0
      %v289 = vadd.f32 0.0, %v288
      %290 = vmatmul.bf16.gmra.mxu0 %v227
      %v291 = vpop.f32.mrf.mxu0
      %v292 = vadd.f32 0.0, %v291
      %v293 = vpop.f32.mrf.mxu0
      %294 = vdwg.mxu0
      %v297 = vrot.slane %v249, 1
      %v298 = vrot.slane %v282, 1
      %301 = vrot.lane.b32.xlu0 %v297, 17
      %v302 = vpop.permute.xlu0 %301
      %303 = vrot.lane.b32.xlu0 %v298, 17
      %v304 = vpop.permute.xlu0 %303
      %v305 = vlaneseq
      %v306 = vand.u32 %v305, 127
      %vm307 = vcmp.lt.s32.totalorder %v306, 17
      %v308 = vsel %vm307, %v302, %v304
      %v309 = vsel %vm307, %v304, %v302
      %v310 = vrot.slane %v249, 2
      %v311 = vrot.slane %v282, 2
      %314 = vrot.lane.b32.xlu0 %v310, 16
      %v315 = vpop.permute.xlu0 %314
      %316 = vrot.lane.b32.xlu0 %v311, 16
      %v317 = vpop.permute.xlu0 %316
      %vm318 = vcmp.lt.s32.totalorder %v306, 16
      %v319 = vsel %vm318, %v315, %v317
      %v320 = vsel %vm318, %v317, %v315
      %v321 = vadd.f32 %v309, %v320
      %v322 = vadd.f32 %v308, %v319
      %v323 = vrot.slane %v249, 3
      %v324 = vrot.slane %v282, 3
      %327 = vrot.lane.b32.xlu0 %v323, 15
      %v328 = vpop.permute.xlu0 %327
      %329 = vrot.lane.b32.xlu0 %v324, 15
      %v330 = vpop.permute.xlu0 %329
      %vm331 = vcmp.lt.s32.totalorder %v306, 15
      %v332 = vsel %vm331, %v328, %v330
      %v333 = vsel %vm331, %v330, %v328
      %v334 = vadd.f32 %v321, %v333
      %v335 = vadd.f32 %v322, %v332
      %v336 = vrot.slane %v249, 4
      %v337 = vrot.slane %v282, 4
      %340 = vrot.lane.b32.xlu0 %v336, 1
      %v341 = vpop.permute.xlu0 %340
      %342 = vrot.lane.b32.xlu0 %v337, 1
      %v343 = vpop.permute.xlu0 %342
      %vm344 = vcmp.lt.s32.totalorder %v306, 1
      %v345 = vsel %vm344, %v341, %v343
      %v346 = vsel %vm344, %v343, %v341
      %v347 = vadd.f32 %v334, %v346
      %v348 = vadd.f32 %v335, %v345
      %v349 = vrot.slane %v249, 5
      %v350 = vrot.slane %v282, 5
      %v353 = vadd.f32 %v347, %v349
      %v354 = vadd.f32 %v348, %v350
      %v355 = vrot.slane %v249, 6
      %v356 = vrot.slane %v282, 6
      %359 = vrot.lane.b32.xlu0 %v355, 127
      %v360 = vpop.permute.xlu0 %359
      %361 = vrot.lane.b32.xlu0 %v356, 127
      %v362 = vpop.permute.xlu0 %361
      %vm363 = vcmp.lt.s32.totalorder %v306, 127
      %v364 = vsel %vm363, %v360, %v362
      %v365 = vsel %vm363, %v362, %v360
      %v366 = vadd.f32 %v353, %v364
      %v367 = vadd.f32 %v354, %v365
      %v368 = vrot.slane %v249, 7
      %v369 = vrot.slane %v282, 7
      %372 = vrot.lane.b32.xlu0 %v368, 113
      %v373 = vpop.permute.xlu0 %372
      %374 = vrot.lane.b32.xlu0 %v369, 113
      %v375 = vpop.permute.xlu0 %374
      %vm376 = vcmp.lt.s32.totalorder %v306, 113
      %v377 = vsel %vm376, %v373, %v375
      %v378 = vsel %vm376, %v375, %v373
      %v379 = vadd.f32 %v366, %v377
      %v380 = vadd.f32 %v367, %v378
      %381 = vrot.lane.b32.xlu0 %v251, 112
      %v382 = vpop.permute.xlu0 %381
      %383 = vrot.lane.b32.xlu0 %v284, 112
      %v384 = vpop.permute.xlu0 %383
      %vm385 = vcmp.lt.s32.totalorder %v306, 112
      %v386 = vsel %vm385, %v382, %v384
      %v387 = vsel %vm385, %v384, %v382
      %v388 = vadd.f32 %v379, %v386
      %v389 = vadd.f32 %v380, %v387
      %v392 = vrot.slane %v251, 1
      %v393 = vrot.slane %v284, 1
      %396 = vrot.lane.b32.xlu0 %v392, 111
      %v397 = vpop.permute.xlu0 %396
      %398 = vrot.lane.b32.xlu0 %v393, 111
      %v399 = vpop.permute.xlu0 %398
      %vm400 = vcmp.lt.s32.totalorder %v306, 111
      %v401 = vsel %vm400, %v397, %v399
      %v402 = vsel %vm400, %v399, %v397
      %v403 = vadd.f32 %v388, %v401
      %v404 = vadd.f32 %v389, %v402
      %v405 = vrot.slane %v251, 2
      %v406 = vrot.slane %v284, 2
      %409 = vrot.lane.b32.xlu0 %v405, 34
      %v410 = vpop.permute.xlu0 %409
      %411 = vrot.lane.b32.xlu0 %v406, 34
      %v412 = vpop.permute.xlu0 %411
      %vm413 = vcmp.lt.s32.totalorder %v306, 34
      %v414 = vsel %vm413, %v410, %v412
      %v415 = vsel %vm413, %v412, %v410
      %v416 = vrot.slane %v251, 3
      %v417 = vrot.slane %v284, 3
      %420 = vrot.lane.b32.xlu0 %v416, 33
      %v421 = vpop.permute.xlu0 %420
      %422 = vrot.lane.b32.xlu0 %v417, 33
      %v423 = vpop.permute.xlu0 %422
      %vm424 = vcmp.lt.s32.totalorder %v306, 33
      %v425 = vsel %vm424, %v421, %v423
      %v426 = vsel %vm424, %v423, %v421
      %v427 = vadd.f32 %v415, %v426
      %v428 = vadd.f32 %v414, %v425
      %v429 = vrot.slane %v251, 4
      %v430 = vrot.slane %v284, 4
      %433 = vrot.lane.b32.xlu0 %v429, 32
      %v434 = vpop.permute.xlu0 %433
      %435 = vrot.lane.b32.xlu0 %v430, 32
      %v436 = vpop.permute.xlu0 %435
      %vm437 = vcmp.lt.s32.totalorder %v306, 32
      %v438 = vsel %vm437, %v434, %v436
      %v439 = vsel %vm437, %v436, %v434
      %v440 = vadd.f32 %v427, %v439
      %v441 = vadd.f32 %v428, %v438
      %v442 = vrot.slane %v251, 5
      %v443 = vrot.slane %v284, 5
      %446 = vrot.lane.b32.xlu0 %v442, 31
      %v447 = vpop.permute.xlu0 %446
      %448 = vrot.lane.b32.xlu0 %v443, 31
      %v449 = vpop.permute.xlu0 %448
      %vm450 = vcmp.lt.s32.totalorder %v306, 31
      %v451 = vsel %vm450, %v447, %v449
      %v452 = vsel %vm450, %v449, %v447
      %v453 = vadd.f32 %v440, %v452
      %v454 = vadd.f32 %v441, %v451
      %v455 = vrot.slane %v251, 6
      %v456 = vrot.slane %v284, 6
      %459 = vrot.lane.b32.xlu0 %v455, 30
      %v460 = vpop.permute.xlu0 %459
      %461 = vrot.lane.b32.xlu0 %v456, 30
      %v462 = vpop.permute.xlu0 %461
      %vm463 = vcmp.lt.s32.totalorder %v306, 30
      %v464 = vsel %vm463, %v460, %v462
      %v465 = vsel %vm463, %v462, %v460
      %v466 = vadd.f32 %v453, %v465
      %v467 = vadd.f32 %v454, %v464
      %v468 = vrot.slane %v251, 7
      %v469 = vrot.slane %v284, 7
      %472 = vrot.lane.b32.xlu0 %v468, 18
      %v473 = vpop.permute.xlu0 %472
      %474 = vrot.lane.b32.xlu0 %v469, 18
      %v475 = vpop.permute.xlu0 %474
      %vm476 = vcmp.lt.s32.totalorder %v306, 18
      %v477 = vsel %vm476, %v473, %v475
      %v478 = vsel %vm476, %v475, %v473
      %v479 = vadd.f32 %v466, %v478
      %v480 = vadd.f32 %v467, %v477
      %481 = vrot.lane.b32.xlu0 %v254, 17
      %v482 = vpop.permute.xlu0 %481
      %483 = vrot.lane.b32.xlu0 %v287, 17
      %v484 = vpop.permute.xlu0 %483
      %v485 = vsel %vm307, %v482, %v484
      %v486 = vsel %vm307, %v484, %v482
      %v487 = vadd.f32 %v479, %v486
      %v488 = vadd.f32 %v480, %v485
      %v491 = vrot.slane %v254, 1
      %v492 = vrot.slane %v287, 1
      %495 = vrot.lane.b32.xlu0 %v491, 16
      %v496 = vpop.permute.xlu0 %495
      %497 = vrot.lane.b32.xlu0 %v492, 16
      %v498 = vpop.permute.xlu0 %497
      %v499 = vsel %vm318, %v496, %v498
      %v500 = vsel %vm318, %v498, %v496
      %v501 = vadd.f32 %v487, %v500
      %v502 = vadd.f32 %v488, %v499
      %v503 = vrot.slane %v254, 2
      %v504 = vrot.slane %v287, 2
      %507 = vrot.lane.b32.xlu0 %v503, 15
      %v508 = vpop.permute.xlu0 %507
      %509 = vrot.lane.b32.xlu0 %v504, 15
      %v510 = vpop.permute.xlu0 %509
      %v511 = vsel %vm331, %v508, %v510
      %v512 = vsel %vm331, %v510, %v508
      %v513 = vadd.f32 %v501, %v512
      %v514 = vadd.f32 %v502, %v511
      %v515 = vrot.slane %v254, 3
      %v516 = vrot.slane %v287, 3
      %519 = vrot.lane.b32.xlu0 %v515, 14
      %v520 = vpop.permute.xlu0 %519
      %521 = vrot.lane.b32.xlu0 %v516, 14
      %v522 = vpop.permute.xlu0 %521
      %vm523 = vcmp.lt.s32.totalorder %v306, 14
      %v524 = vsel %vm523, %v520, %v522
      %v525 = vsel %vm523, %v522, %v520
      %v526 = vadd.f32 %v513, %v525
      %v527 = vadd.f32 %v514, %v524
      %v528 = vrot.slane %v254, 4
      %v529 = vrot.slane %v287, 4
      %532 = vrot.lane.b32.xlu0 %v528, 2
      %v533 = vpop.permute.xlu0 %532
      %534 = vrot.lane.b32.xlu0 %v529, 2
      %v535 = vpop.permute.xlu0 %534
      %vm536 = vcmp.lt.s32.totalorder %v306, 2
      %v537 = vsel %vm536, %v533, %v535
      %v538 = vsel %vm536, %v535, %v533
      %v539 = vadd.f32 %v526, %v538
      %v540 = vadd.f32 %v527, %v537
      %v541 = vrot.slane %v254, 5
      %v542 = vrot.slane %v287, 5
      %545 = vrot.lane.b32.xlu0 %v541, 1
      %v546 = vpop.permute.xlu0 %545
      %547 = vrot.lane.b32.xlu0 %v542, 1
      %v548 = vpop.permute.xlu0 %547
      %v549 = vsel %vm344, %v546, %v548
      %v550 = vsel %vm344, %v548, %v546
      %v551 = vadd.f32 %v539, %v550
      %v552 = vadd.f32 %v540, %v549
      %v553 = vrot.slane %v254, 6
      %v554 = vrot.slane %v287, 6
      %v557 = vadd.f32 %v551, %v553
      %v558 = vadd.f32 %v552, %v554
      %v559 = vrot.slane %v254, 7
      %v560 = vrot.slane %v287, 7
      %563 = vrot.lane.b32.xlu0 %v559, 127
      %v564 = vpop.permute.xlu0 %563
      %565 = vrot.lane.b32.xlu0 %v560, 127
      %v566 = vpop.permute.xlu0 %565
      %v567 = vsel %vm363, %v564, %v566
      %v568 = vsel %vm363, %v566, %v564
      %v569 = vadd.f32 %v557, %v567
      %v570 = vadd.f32 %v558, %v568
      %571 = vrot.lane.b32.xlu0 %v256, 126
      %v572 = vpop.permute.xlu0 %571
      %573 = vrot.lane.b32.xlu0 %v289, 126
      %v574 = vpop.permute.xlu0 %573
      %vm575 = vcmp.lt.s32.totalorder %v306, 126
      %v576 = vsel %vm575, %v572, %v574
      %v577 = vsel %vm575, %v574, %v572
      %v578 = vadd.f32 %v569, %v576
      %v579 = vadd.f32 %v570, %v577
      %v582 = vrot.slane %v256, 1
      %v583 = vrot.slane %v289, 1
      %586 = vrot.lane.b32.xlu0 %v582, 114
      %v587 = vpop.permute.xlu0 %586
      %588 = vrot.lane.b32.xlu0 %v583, 114
      %v589 = vpop.permute.xlu0 %588
      %vm590 = vcmp.lt.s32.totalorder %v306, 114
      %v591 = vsel %vm590, %v587, %v589
      %v592 = vsel %vm590, %v589, %v587
      %v593 = vadd.f32 %v578, %v591
      %v594 = vadd.f32 %v579, %v592
      %v595 = vrot.slane %v256, 2
      %v596 = vrot.slane %v289, 2
      %599 = vrot.lane.b32.xlu0 %v595, 113
      %v600 = vpop.permute.xlu0 %599
      %601 = vrot.lane.b32.xlu0 %v596, 113
      %v602 = vpop.permute.xlu0 %601
      %v603 = vsel %vm376, %v600, %v602
      %v604 = vsel %vm376, %v602, %v600
      %v605 = vadd.f32 %v593, %v603
      %v606 = vadd.f32 %v594, %v604
      %v607 = vrot.slane %v256, 3
      %v608 = vrot.slane %v289, 3
      %611 = vrot.lane.b32.xlu0 %v607, 112
      %v612 = vpop.permute.xlu0 %611
      %613 = vrot.lane.b32.xlu0 %v608, 112
      %v614 = vpop.permute.xlu0 %613
      %v615 = vsel %vm385, %v612, %v614
      %v616 = vsel %vm385, %v614, %v612
      %v617 = vadd.f32 %v605, %v615
      %v618 = vadd.f32 %v606, %v616
      %v619 = vrot.slane %v256, 4
      %v620 = vrot.slane %v289, 4
      %623 = vrot.lane.b32.xlu0 %v619, 111
      %v624 = vpop.permute.xlu0 %623
      %625 = vrot.lane.b32.xlu0 %v620, 111
      %v626 = vpop.permute.xlu0 %625
      %v627 = vsel %vm400, %v624, %v626
      %v628 = vsel %vm400, %v626, %v624
      %v629 = vadd.f32 %v617, %v627
      %v630 = vadd.f32 %v618, %v628
      %v631 = vrot.slane %v256, 5
      %v632 = vrot.slane %v289, 5
      %635 = vrot.lane.b32.xlu0 %v631, 110
      %v636 = vpop.permute.xlu0 %635
      %637 = vrot.lane.b32.xlu0 %v632, 110
      %v638 = vpop.permute.xlu0 %637
      %vm639 = vcmp.lt.s32.totalorder %v306, 110
      %v640 = vsel %vm639, %v636, %v638
      %v641 = vsel %vm639, %v638, %v636
      %v642 = vadd.f32 %v629, %v640
      %v643 = vadd.f32 %v630, %v641
      %v644 = vrot.slane %v256, 6
      %v645 = vrot.slane %v289, 6
      %648 = vrot.lane.b32.xlu0 %v644, 98
      %v649 = vpop.permute.xlu0 %648
      %650 = vrot.lane.b32.xlu0 %v645, 98
      %v651 = vpop.permute.xlu0 %650
      %vm652 = vcmp.lt.s32.totalorder %v306, 98
      %v653 = vsel %vm652, %v649, %v651
      %v654 = vsel %vm652, %v651, %v649
      %v655 = vadd.f32 %v642, %v653
      %v656 = vadd.f32 %v643, %v654
      %v657 = vrot.slane %v256, 7
      %v658 = vrot.slane %v289, 7
      %661 = vrot.lane.b32.xlu0 %v657, 97
      %v662 = vpop.permute.xlu0 %661
      %663 = vrot.lane.b32.xlu0 %v658, 97
      %v664 = vpop.permute.xlu0 %663
      %vm665 = vcmp.lt.s32.totalorder %v306, 97
      %v666 = vsel %vm665, %v662, %v664
      %v667 = vsel %vm665, %v664, %v662
      %v668 = vadd.f32 %v655, %v666
      %v669 = vadd.f32 %v656, %v667
      %670 = vrot.lane.b32.xlu0 %v259, 96
      %v671 = vpop.permute.xlu0 %670
      %672 = vrot.lane.b32.xlu0 %v292, 96
      %v673 = vpop.permute.xlu0 %672
      %vm674 = vcmp.lt.s32.totalorder %v306, 96
      %v675 = vsel %vm674, %v671, %v673
      %v676 = vsel %vm674, %v673, %v671
      %v677 = vadd.f32 %v668, %v675
      %v678 = vadd.f32 %v669, %v676
      %v681 = vrot.slane %v259, 1
      %v682 = vrot.slane %v292, 1
      %685 = vrot.lane.b32.xlu0 %v681, 95
      %v686 = vpop.permute.xlu0 %685
      %687 = vrot.lane.b32.xlu0 %v682, 95
      %v688 = vpop.permute.xlu0 %687
      %vm689 = vcmp.lt.s32.totalorder %v306, 95
      %v690 = vsel %vm689, %v686, %v688
      %v691 = vsel %vm689, %v688, %v686
      %v692 = vadd.f32 %v677, %v690
      %v693 = vadd.f32 %v678, %v691
      %v694 = vrot.slane %v259, 2
      %v695 = vrot.slane %v292, 2
      %698 = vrot.lane.b32.xlu0 %v694, 94
      %v699 = vpop.permute.xlu0 %698
      %700 = vrot.lane.b32.xlu0 %v695, 94
      %v701 = vpop.permute.xlu0 %700
      %vm702 = vcmp.lt.s32.totalorder %v306, 94
      %v703 = vsel %vm702, %v699, %v701
      %v704 = vsel %vm702, %v701, %v699
      %v705 = vadd.f32 %v692, %v703
      %v706 = vadd.f32 %v693, %v704
      %v707 = vsub.f32 0.0, %v249
      %v708 = vsub.f32 0.0, %v282
      %v709 = vmul.f32 %v707, 1.442695
      %v710 = vpow.pop %v709
      %v711 = vmul.f32 %v708, 1.442695
      %v712 = vpow.pop %v711
      %v713 = vadd.f32 %v710, 1.0
      %v714 = vadd.f32 %v712, 1.0
      %v715 = vrcp.pop %v713
      %v716 = vrcp.pop %v714
      %v717 = vsub.f32 0.0, %v403
      %v718 = vsub.f32 0.0, %v404
      %v719 = vmul.f32 %v717, 1.442695
      %v720 = vpow.pop %v719
      %v721 = vmul.f32 %v718, 1.442695
      %v722 = vpow.pop %v721
      %v723 = vadd.f32 %v720, 1.0
      %v724 = vadd.f32 %v722, 1.0
      %v725 = vrcp.pop %v723
      %v726 = vrcp.pop %v724
      %v727 = vadd.f32 %v715, %v725
      %v728 = vadd.f32 %v716, %v726
      %v729 = vsub.f32 0.0, %v705
      %v730 = vsub.f32 0.0, %v706
      %v731 = vmul.f32 %v729, 1.442695
      %v732 = vpow.pop %v731
      %v733 = vmul.f32 %v730, 1.442695
      %v734 = vpow.pop %v733
      %v735 = vadd.f32 %v732, 1.0
      %v736 = vadd.f32 %v734, 1.0
      %v737 = vrcp.pop %v735
      %v738 = vrcp.pop %v736
      %v739 = vadd.f32 %v727, %v737
      %v740 = vadd.f32 %v728, %v738
      %v741 = vmul.f32 %v739, 0.33333334
      %v742 = vmul.f32 %v740, 0.33333334
      %v743 = vsub.f32 %v239, %v244
      %v744 = vsub.f32 %v272, %v277
      %v745 = vsub.f32 %v241, %v246
      %v746 = vsub.f32 %v274, %v279
      %v747 = vperm.slane %v741, 0
      %v748 = vperm.slane %v742, 0
      %v749 = vmul.f32 %v747, %v743
      %v750 = vmul.f32 %v748, %v744
      %v751 = vmul.f32 %v747, %v745
      %v752 = vmul.f32 %v748, %v746
      %v753 = vadd.f32 %v244, %v749
      %v754 = vadd.f32 %v277, %v750
      %v755 = vadd.f32 %v246, %v751
      %v756 = vadd.f32 %v279, %v752
      %757 = vst [vmem:[%s143] sm:$0xff] %v753
      %758 = vst [vmem:[%s143 + $0x8] sm:$0xff] %v754
      %759 = vst [vmem:[%s143 + $0x10] sm:$0xff] %v755
      %760 = vst [vmem:[%s143 + $0x18] sm:$0xff] %v756
      %p761 = scmp.lt.s32.totalorder %s13, 1
      %s762 = scalar_select %p761, %s13, 1
      %s763 = smul.addr %s762, 4
      %s764 = smul.addr %s763, 8
      %s765 = scalar_lea.vmem %s2, %s764
      // Predicated region
      $region29: #{fuse_unit_forward.1} parent=27 // pred_check
        %p766 = pneg %p78
      $region30: #{fuse_unit_forward.1} parent=27 // pred_check_branch
        %768 = sbr.rel (%p766) target = $region32
      $region31: #{fuse_unit_forward.1} parent=27 // pred_region
        _
      $region32: #{fuse_unit_forward.1} parent=27 // pred_fallthru
        _
    $region28: #{fuse_unit_forward.1} parent=5 // pred_fallthru
      _
    %p769 = scmp.le.s32.totalorder 2, %s8
    // Predicated region
    $region33: #{fuse_unit_forward.1} parent=5 // pred_check
      %p770 = pneg %p769
    $region34: #{fuse_unit_forward.1} parent=5 // pred_check_branch
      %772 = sbr.rel (%p770) target = $region36
    $region35: #{fuse_unit_forward.1} parent=5 // pred_region
      %s773 = ssub.s32 %s8, 2
      // Predicated region
      $region37: #{fuse_unit_forward.1} parent=35 // pred_check
        %p774 = pneg %p84
      $region38: #{fuse_unit_forward.1} parent=35 // pred_check_branch
        %776 = sbr.rel (%p774) target = $region40
      $region39: #{fuse_unit_forward.1} parent=35 // pred_region
        %p777 = scmp.lt.s32.totalorder %s14, 1
        %s778 = scalar_select %p777, %s14, 1
        %s779 = smul.addr %s778, 4
        %s780 = smul.addr %s779, 8
        %s781 = scalar_lea.vmem %s2, %s780
      $region40: #{fuse_unit_forward.1} parent=35 // pred_fallthru
        _
    $region36: #{fuse_unit_forward.1} parent=5 // pred_fallthru
      _
  $region6: #{fuse_unit_forward.1} parent=0 // loop_footer
    %s12 = sadd.s32 1, %s8
  $region7: #{fuse_unit_forward.1} parent=0 // loop_footer_branch
    %7 = sbr.rel target = $region3
  $region8: #{fuse_unit_forward.1} parent=0 // loop_exit
    _

</llo_original>
